<compile_context>
chip_gen: v7x
topology: tpu7x:2x2x1
jax: 0.10.0
libtpu: 0.0.40
codegen_flags: <defaults>
</compile_context>

<pallas_src>
import functools

import jax
import jax.numpy as jnp
from jax import lax
from jax.experimental import pallas as pl
from jax.experimental.pallas import tpu as pltpu


def _shuffle_attention_kernel(H, W, bblk, G, cpg,
                              x_ref, mlp1_ref, mlp2_ref, convp_ref, o_ref):
    HW = H * W
    C = G * cpg
    CB = bblk * C
    f32 = jnp.float32

    x = x_ref[...].astype(f32)                               # (CB, HW)

    # ---- channel attention: global mean -> per-group fc1 -> relu -> fc2 -> sigmoid.
    # VPU path: block-diagonal (image x group) weights make one broadcast-multiply +
    # one reduction cover every tiny MLP at once; no N=1 MXU matmuls on the critical
    # path of each small grid step.
    m = jnp.sum(x, axis=1, keepdims=True) * (1.0 / HW)       # (CB, 1)
    mlp1 = mlp1_ref[...]                                     # (CB+1, GB*cr): [w1t ; b1]
    h = jnp.sum(mlp1[:CB, :] * m, axis=0, keepdims=True) + mlp1[CB:, :]
    h = jnp.maximum(h, 0.0)                                  # (1, GB*cr)
    mlp2 = mlp2_ref[...]                                     # (CB, GB*cr+1): [w2 | b2]
    ngr = mlp2.shape[1] - 1
    a = jnp.sum(mlp2[:, :ngr] * h, axis=1, keepdims=True) + mlp2[:, ngr:]
    ch = jax.nn.sigmoid(a)                                   # (CB, 1)

    # ---- spatial attention: depthwise 3x3 conv (zero pad=1) as a SEPARABLE stencil:
    # 2 horizontal rolls (masked left/right), three per-row weighted sums, then 2
    # vertical rolls (masked up/down). BN scale folded into the tap weights; conv bias
    # + BN shift folded into column 9 of convp.
    flat = lax.broadcasted_iota(jnp.int32, (1, HW), 1)
    col = flat % W
    ok_lf = col >= 1                    # col w-1 exists
    ok_rt = col <= W - 2                # col w+1 exists
    ok_up = flat >= W                   # row h-1 exists
    ok_dn = flat < (H - 1) * W          # row h+1 exists

    cw = convp_ref[...].astype(f32)                          # (CB, 10)

    def w(t):                                                # per-channel tap weight
        return cw[:, t:t + 1]                                # (CB, 1)

    xm = jnp.where(ok_lf, pltpu.roll(x, shift=1, axis=1), 0.0)        # x[:, i-1]
    xp = jnp.where(ok_rt, pltpu.roll(x, shift=HW - 1, axis=1), 0.0)   # x[:, i+1]
    s_up = w(0) * xm + w(1) * x + w(2) * xp                  # di = -1 row
    s_md = w(3) * xm + w(4) * x + w(5) * xp                  # di =  0 row
    s_dn = w(6) * xm + w(7) * x + w(8) * xp                  # di = +1 row
    acc = (s_md
           + jnp.where(ok_up, pltpu.roll(s_up, shift=W, axis=1), 0.0)
           + jnp.where(ok_dn, pltpu.roll(s_dn, shift=HW - W, axis=1), 0.0))
    sp = jax.nn.sigmoid(acc + w(9))                          # (CB, HW)

    out = x * ch * sp                                        # (CB, HW)

    # ---- fused channel shuffle: one sublane permute + one full unmasked store per
    # image (instead of G*cpg masked single-sublane stores). Output block (cpg, G, HW)
    # makes the wrapper's (B, C, H, W) reshape a free view.
    for b in range(bblk):
        img = out[b * C:(b + 1) * C, :].reshape(G, cpg, HW)
        o_ref[b] = jnp.swapaxes(img, 0, 1).astype(o_ref.dtype)


def shuffle_attention(x, params, groups, images_per_step=1):
    """ShuffleAttention forward. BatchNorm runs in inference (running-stats) mode."""
    B, C, H, W = x.shape
    G = groups
    assert C % G == 0, "channels must be divisible by groups"
    cpg = C // G
    cr = params["w1"].shape[1]
    HW = H * W
    eps = 1e-5
    f32 = jnp.float32

    # Lane-dense layout preconditions (perf, not correctness): flattened spatial fills
    # whole 128-lane vregs, channels fill whole 8-row sublane tiles.
    # TODO(synk): pad HW / C in the wrapper (and mask pool + stencil edges) if a caller
    # needs shapes that violate this.
    assert HW % 128 == 0, f"H*W={HW} must be a multiple of 128 for the lane-dense layout"
    assert C % 8 == 0, f"C={C} must be a multiple of 8 sublanes"

    bblk = images_per_step
    assert B % bblk == 0, "images_per_step must divide batch"
    CB = bblk * C        # channels per grid step (bblk images stacked on sublanes)
    GB = bblk * G        # (image, group) pairs per grid step
    nsteps = B // bblk

    # TODO(synk): BatchNorm2d is folded with running statistics (inference mode);
    # training-mode batch statistics would couple grid blocks and are not handled.
    bn_scale = params["bn_gamma"].astype(f32) * lax.rsqrt(params["bn_var"].astype(f32) + eps)
    bn_shift = params["bn_beta"].astype(f32) - params["bn_mean"].astype(f32) * bn_scale

    # Channel-attention MLP packed for the in-kernel VPU path. Stacking bblk images is
    # equivalent to having bblk*G groups, so one kron covers batching and grouping.
    #   mlp1 = [kron(I_GB, w1) ; b1-row]   -> (CB+1, GB*cr)
    #   mlp2 = [kron(I_GB, w2^T) | b2-col] -> (CB, GB*cr+1)
    eye_gb = jnp.eye(GB, dtype=f32)
    w1t = jnp.kron(eye_gb, params["w1"].astype(f32))            # (CB, GB*cr)
    b1r = jnp.tile(params["b1"].astype(f32), GB)[None, :]       # (1, GB*cr)
    mlp1 = jnp.concatenate([w1t, b1r], axis=0)                  # (CB+1, GB*cr)
    w2t = jnp.kron(eye_gb, params["w2"].T.astype(f32))          # (CB, GB*cr)
    b2c = jnp.tile(params["b2"].astype(f32), GB)[:, None]       # (CB, 1)
    mlp2 = jnp.concatenate([w2t, b2c], axis=1)                  # (CB, GB*cr+1)

    # Depthwise 3x3 taps with BN scale folded in (cols 0..8); col 9 = conv bias + BN
    # shift. One packed operand instead of two.
    cw = params["conv_w"].reshape(cpg, 9).astype(f32) * bn_scale[:, None]   # (cpg, 9)
    cw_full = jnp.tile(cw, (GB, 1))                                         # (CB, 9)
    t_col = jnp.tile(params["conv_b"].astype(f32) * bn_scale + bn_shift, GB)[:, None]
    convp = jnp.concatenate([cw_full, t_col], axis=1)                       # (CB, 10)

    # Channels on sublanes, flattened H*W on lanes (free view). Folding bblk images per
    # step amortises the ~0.35 us/step grid overhead on single-TC chips (v5e/v6e); keep
    # >= 2 steps on v7x so both TensorCores stay busy.
    x2 = x.reshape(nsteps, CB, HW)

    # Explicit scoped-VMEM budget: in + out blocks are each double-buffered.
    # TODO(synk): at production sizes where this exceeds ~64 MiB (v7x physical), add a
    # group-aligned channel grid axis (MLP and depthwise conv both split cleanly on G).
    # TODO(synk): carry x / the output as bf16 in HBM if the surrounding model allows
    # it -- the kernel is HBM-bound at production sizes on every TPU generation.
    blk_bytes = CB * HW * x.dtype.itemsize
    vmem_limit = int(min(64 * 1024 * 1024, max(8 * 1024 * 1024, 6 * blk_bytes)))

    out5 = pl.pallas_call(
        functools.partial(_shuffle_attention_kernel, H, W, bblk, G, cpg),
        out_shape=jax.ShapeDtypeStruct((nsteps, bblk, cpg, G, HW), x.dtype),
        grid=(nsteps,),
        in_specs=[
            pl.BlockSpec((None, CB, HW), lambda b: (b, 0, 0)),
            pl.BlockSpec((CB + 1, GB * cr), lambda b: (0, 0)),
            pl.BlockSpec((CB, GB * cr + 1), lambda b: (0, 0)),
            pl.BlockSpec((CB, 10), lambda b: (0, 0)),
        ],
        out_specs=pl.BlockSpec((None, bblk, cpg, G, HW), lambda b: (b, 0, 0, 0, 0)),
        compiler_params=pltpu.CompilerParams(
            dimension_semantics=("parallel",),
            vmem_limit_bytes=vmem_limit),
    )(x2, mlp1, mlp2, convp)

    # (nsteps, bblk, cpg, G, HW) -> (B, C, H, W): merging (cpg, G) realises the channel
    # shuffle (new channel index = c*G + g) as a free reshape; no extra HBM transpose.
    return out5.reshape(B, C, H, W)


def shuffle_attention_ref(x, params, groups):
    """Pure-JAX reference mirroring the PyTorch forward (BN in eval mode)."""
    B, C, H, W = x.shape
    cpg = C // groups
    eps = 1e-5
    hi = lax.Precision.HIGHEST
    x5 = x.reshape(B, groups, cpg, H, W)
    xc = x5.mean(axis=(3, 4))                                   # (B, G, cpg)
    h = jax.nn.relu(jnp.einsum("bgc,cr->bgr", xc, params["w1"], precision=hi)
                    + params["b1"])
    ch = jax.nn.sigmoid(jnp.einsum("bgr,rc->bgc", h, params["w2"], precision=hi)
                        + params["b2"])[..., None, None]
    xs = x5.reshape(B * groups, cpg, H, W)
    conv = lax.conv_general_dilated(
        xs, params["conv_w"][:, None, :, :], (1, 1), "SAME",
        feature_group_count=cpg,
        dimension_numbers=("NCHW", "OIHW", "NCHW"), precision=hi)
    conv = conv + params["conv_b"][None, :, None, None]
    scale = params["bn_gamma"] / jnp.sqrt(params["bn_var"] + eps)
    shift = params["bn_beta"] - params["bn_mean"] * scale
    sp = jax.nn.sigmoid(conv * scale[None, :, None, None]
                        + shift[None, :, None, None])
    sp = sp.reshape(B, groups, cpg, H, W)
    out = (x5 * ch * sp).reshape(B, C, H, W)
    out = out.reshape(B, groups, cpg, H, W).transpose(0, 2, 1, 3, 4).reshape(B, C, H, W)
    return out


if __name__ == "__main__":
    key = jax.random.PRNGKey(0)
    B, C, H, W, G = 2, 32, 16, 16, 8          # cpg=4, cr=1; HW=256 lanes, C=32 sublanes
    cpg = C // G
    cr = cpg // 4
    ks = jax.random.split(key, 10)
    x = jax.random.normal(ks[0], (B, C, H, W), jnp.float32)
    params = {
        "w1": 0.5 * jax.random.normal(ks[1], (cpg, cr), jnp.float32),
        "b1": 0.1 * jax.random.normal(ks[2], (cr,), jnp.float32),
        "w2": 0.5 * jax.random.normal(ks[3], (cr, cpg), jnp.float32),
        "b2": 0.1 * jax.random.normal(ks[4], (cpg,), jnp.float32),
        "conv_w": 0.3 * jax.random.normal(ks[5], (cpg, 3, 3), jnp.float32),
        "conv_b": 0.1 * jax.random.normal(ks[6], (cpg,), jnp.float32),
        "bn_gamma": 1.0 + 0.1 * jax.random.normal(ks[7], (cpg,), jnp.float32),
        "bn_beta": 0.1 * jax.random.normal(ks[8], (cpg,), jnp.float32),
        "bn_mean": 0.05 * jax.random.normal(ks[9], (cpg,), jnp.float32),
        "bn_var": jnp.ones((cpg,), jnp.float32),
    }

    ref = jax.block_until_ready(shuffle_attention_ref(x, params, G))

    # grid=(B,): two parallel steps keep both v7x TensorCores busy.
    fwd1 = jax.jit(functools.partial(shuffle_attention, groups=G, images_per_step=1))
    out1 = jax.block_until_ready(fwd1(x, params))
    assert out1.shape == (B, C, H, W), out1.shape
    err1 = float(jnp.max(jnp.abs(out1 - ref)))
    assert err1 < 2e-3, f"images_per_step=1: max abs err too large: {err1}"

    # Folding both images into one grid step (grid=(1,)) amortises per-step overhead on
    # single-TensorCore chips (v5e / v6e).
    fwd2 = jax.jit(functools.partial(shuffle_attention, groups=G, images_per_step=2))
    out2 = jax.block_until_ready(fwd2(x, params))
    err2 = float(jnp.max(jnp.abs(out2 - ref)))
    assert err2 < 2e-3, f"images_per_step=2: max abs err too large: {err2}"

    print("KERNEL_OK")
</pallas_src>

<mosaic_0001>
module attributes {stable_mosaic.version = 11 : i64} {
  func.func @_shuffle_attention_kernel(%arg0: i32, %arg1: memref<1x32x256xf32, #tpu.memory_space<vmem>>, %arg2: memref<33x8xf32, #tpu.memory_space<vmem>>, %arg3: memref<32x9xf32, #tpu.memory_space<vmem>>, %arg4: memref<32x10xf32, #tpu.memory_space<vmem>>, %arg5: memref<1x1x4x8x256xf32, #tpu.memory_space<vmem>>) attributes {dimension_semantics = [#tpu.dimension_semantics<parallel>], iteration_bounds = array<i64: 2>, scalar_prefetch = 0 : i64, scratch_operands = 0 : i64, tpu.core_type = #tpu.core_type<tc>, window_params = [{transform_indices = @transform_0, window_bounds = array<i64: 1, 32, 256>}, {pipeline_mode = #tpu.pipeline_mode<synchronous>, transform_indices = @transform_1, window_bounds = array<i64: 33, 8>}, {pipeline_mode = #tpu.pipeline_mode<synchronous>, transform_indices = @transform_2, window_bounds = array<i64: 32, 9>}, {pipeline_mode = #tpu.pipeline_mode<synchronous>, transform_indices = @transform_3, window_bounds = array<i64: 32, 10>}, {transform_indices = @transform_4, window_bounds = array<i64: 1, 1, 4, 8, 256>}]} {
    %c0 = arith.constant 0 : index
    %c0_0 = arith.constant 0 : index
    %c0_1 = arith.constant 0 : index
    %0 = vector.load %arg1[%c0, %c0_0, %c0_1] : memref<1x32x256xf32, #tpu.memory_space<vmem>>, vector<1x32x256xf32>
    %1 = vector.shape_cast %0 : vector<1x32x256xf32> to vector<32x256xf32>
    %cst = arith.constant dense<0.000000e+00> : vector<32xf32>
    %2 = vector.multi_reduction <add>, %1, %cst [1] : vector<32x256xf32> to vector<32xf32>
    %3 = vector.shape_cast %2 : vector<32xf32> to vector<32x1xf32>
    %cst_2 = arith.constant 3.906250e-03 : f32
    %4 = vector.broadcast %cst_2 : f32 to vector<32x1xf32>
    %5 = arith.mulf %3, %4 : vector<32x1xf32>
    %c0_3 = arith.constant 0 : index
    %c0_4 = arith.constant 0 : index
    %6 = vector.load %arg2[%c0_3, %c0_4] : memref<33x8xf32, #tpu.memory_space<vmem>>, vector<33x8xf32>
    %7 = vector.extract_strided_slice %6 {offsets = [0, 0], sizes = [32, 8], strides = [1, 1]} : vector<33x8xf32> to vector<32x8xf32>
    %8 = vector.broadcast %5 : vector<32x1xf32> to vector<32x8xf32>
    %9 = arith.mulf %7, %8 : vector<32x8xf32>
    %cst_5 = arith.constant dense<0.000000e+00> : vector<8xf32>
    %10 = vector.multi_reduction <add>, %9, %cst_5 [0] : vector<32x8xf32> to vector<8xf32>
    %11 = vector.shape_cast %10 : vector<8xf32> to vector<1x8xf32>
    %12 = vector.extract_strided_slice %6 {offsets = [32, 0], sizes = [1, 8], strides = [1, 1]} : vector<33x8xf32> to vector<1x8xf32>
    %13 = arith.addf %11, %12 : vector<1x8xf32>
    %cst_6 = arith.constant 0.000000e+00 : f32
    %14 = vector.broadcast %cst_6 : f32 to vector<1x8xf32>
    %15 = arith.maximumf %13, %14 : vector<1x8xf32>
    %c0_7 = arith.constant 0 : index
    %c0_8 = arith.constant 0 : index
    %16 = vector.load %arg3[%c0_7, %c0_8] : memref<32x9xf32, #tpu.memory_space<vmem>>, vector<32x9xf32>
    %17 = vector.extract_strided_slice %16 {offsets = [0, 0], sizes = [32, 8], strides = [1, 1]} : vector<32x9xf32> to vector<32x8xf32>
    %18 = vector.broadcast %15 : vector<1x8xf32> to vector<32x8xf32>
    %19 = arith.mulf %17, %18 : vector<32x8xf32>
    %cst_9 = arith.constant dense<0.000000e+00> : vector<32xf32>
    %20 = vector.multi_reduction <add>, %19, %cst_9 [1] : vector<32x8xf32> to vector<32xf32>
    %21 = vector.shape_cast %20 : vector<32xf32> to vector<32x1xf32>
    %22 = vector.extract_strided_slice %16 {offsets = [0, 8], sizes = [32, 1], strides = [1, 1]} : vector<32x9xf32> to vector<32x1xf32>
    %23 = arith.addf %21, %22 : vector<32x1xf32>
    %24 = arith.negf %23 : vector<32x1xf32>
    %25 = math.exp %24 : vector<32x1xf32>
    %cst_10 = arith.constant 1.000000e+00 : f32
    %26 = vector.broadcast %cst_10 : f32 to vector<32x1xf32>
    %27 = arith.addf %26, %25 : vector<32x1xf32>
    %28 = arith.divf %26, %27 : vector<32x1xf32>
    %29 = tpu.iota {dimensions = array<i32: 1>} : vector<1x256xi32>
    %c16_i32 = arith.constant 16 : i32
    %c0_i32 = arith.constant 0 : i32
    %30 = arith.cmpi eq, %c16_i32, %c0_i32 : i32
    %c1_i32 = arith.constant 1 : i32
    %31 = arith.select %30, %c1_i32, %c16_i32 : i32
    %32 = vector.broadcast %31 : i32 to vector<1x256xi32>
    %33 = arith.remsi %29, %32 : vector<1x256xi32>
    %c0_i32_11 = arith.constant 0 : i32
    %34 = vector.broadcast %c0_i32_11 : i32 to vector<1x256xi32>
    %35 = arith.cmpi ne, %33, %34 : vector<1x256xi32>
    %c0_i32_12 = arith.constant 0 : i32
    %36 = vector.broadcast %c0_i32_12 : i32 to vector<1x256xi32>
    %37 = arith.cmpi slt, %33, %36 : vector<1x256xi32>
    %c0_i32_13 = arith.constant 0 : i32
    %38 = arith.cmpi slt, %31, %c0_i32_13 : i32
    %39 = vector.broadcast %38 : i1 to vector<1x256xi1>
    %40 = vector.broadcast %39 : vector<1x256xi1> to vector<1x256xi1>
    %41 = arith.xori %37, %40 : vector<1x256xi1>
    %42 = arith.andi %41, %35 : vector<1x256xi1>
    %43 = vector.broadcast %31 : i32 to vector<1x256xi32>
    %44 = arith.addi %33, %43 : vector<1x256xi32>
    %45 = arith.select %42, %44, %33 : vector<1x256xi1>, vector<1x256xi32>
    %c1_i32_14 = arith.constant 1 : i32
    %46 = vector.broadcast %c1_i32_14 : i32 to vector<1x256xi32>
    %47 = arith.cmpi sge, %45, %46 : vector<1x256xi32>
    %c14_i32 = arith.constant 14 : i32
    %48 = vector.broadcast %c14_i32 : i32 to vector<1x256xi32>
    %49 = arith.cmpi sle, %45, %48 : vector<1x256xi32>
    %c16_i32_15 = arith.constant 16 : i32
    %50 = vector.broadcast %c16_i32_15 : i32 to vector<1x256xi32>
    %51 = arith.cmpi sge, %29, %50 : vector<1x256xi32>
    %c240_i32 = arith.constant 240 : i32
    %52 = vector.broadcast %c240_i32 : i32 to vector<1x256xi32>
    %53 = arith.cmpi slt, %29, %52 : vector<1x256xi32>
    %c0_16 = arith.constant 0 : index
    %c0_17 = arith.constant 0 : index
    %54 = vector.load %arg4[%c0_16, %c0_17] : memref<32x10xf32, #tpu.memory_space<vmem>>, vector<32x10xf32>
    %c1_i32_18 = arith.constant 1 : i32
    %55 = tpu.dynamic_rotate %1 by %c1_i32_18 dim 1 : vector<32x256xf32>, i32 -> vector<32x256xf32>
    %cst_19 = arith.constant 0.000000e+00 : f32
    %56 = vector.shape_cast %47 : vector<1x256xi1> to vector<1x256xi1>
    %57 = vector.broadcast %56 : vector<1x256xi1> to vector<32x256xi1>
    %58 = vector.broadcast %cst_19 : f32 to vector<32x256xf32>
    %59 = arith.select %57, %55, %58 : vector<32x256xi1>, vector<32x256xf32>
    %c255_i32 = arith.constant 255 : i32
    %60 = tpu.dynamic_rotate %1 by %c255_i32 dim 1 : vector<32x256xf32>, i32 -> vector<32x256xf32>
    %cst_20 = arith.constant 0.000000e+00 : f32
    %61 = vector.shape_cast %49 : vector<1x256xi1> to vector<1x256xi1>
    %62 = vector.broadcast %61 : vector<1x256xi1> to vector<32x256xi1>
    %63 = vector.broadcast %cst_20 : f32 to vector<32x256xf32>
    %64 = arith.select %62, %60, %63 : vector<32x256xi1>, vector<32x256xf32>
    %65 = vector.extract_strided_slice %54 {offsets = [0, 0], sizes = [32, 1], strides = [1, 1]} : vector<32x10xf32> to vector<32x1xf32>
    %66 = vector.broadcast %65 : vector<32x1xf32> to vector<32x256xf32>
    %67 = arith.mulf %66, %59 : vector<32x256xf32>
    %68 = vector.extract_strided_slice %54 {offsets = [0, 1], sizes = [32, 1], strides = [1, 1]} : vector<32x10xf32> to vector<32x1xf32>
    %69 = vector.broadcast %68 : vector<32x1xf32> to vector<32x256xf32>
    %70 = arith.mulf %69, %1 : vector<32x256xf32>
    %71 = arith.addf %67, %70 : vector<32x256xf32>
    %72 = vector.extract_strided_slice %54 {offsets = [0, 2], sizes = [32, 1], strides = [1, 1]} : vector<32x10xf32> to vector<32x1xf32>
    %73 = vector.broadcast %72 : vector<32x1xf32> to vector<32x256xf32>
    %74 = arith.mulf %73, %64 : vector<32x256xf32>
    %75 = arith.addf %71, %74 : vector<32x256xf32>
    %76 = vector.extract_strided_slice %54 {offsets = [0, 3], sizes = [32, 1], strides = [1, 1]} : vector<32x10xf32> to vector<32x1xf32>
    %77 = vector.broadcast %76 : vector<32x1xf32> to vector<32x256xf32>
    %78 = arith.mulf %77, %59 : vector<32x256xf32>
    %79 = vector.extract_strided_slice %54 {offsets = [0, 4], sizes = [32, 1], strides = [1, 1]} : vector<32x10xf32> to vector<32x1xf32>
    %80 = vector.broadcast %79 : vector<32x1xf32> to vector<32x256xf32>
    %81 = arith.mulf %80, %1 : vector<32x256xf32>
    %82 = arith.addf %78, %81 : vector<32x256xf32>
    %83 = vector.extract_strided_slice %54 {offsets = [0, 5], sizes = [32, 1], strides = [1, 1]} : vector<32x10xf32> to vector<32x1xf32>
    %84 = vector.broadcast %83 : vector<32x1xf32> to vector<32x256xf32>
    %85 = arith.mulf %84, %64 : vector<32x256xf32>
    %86 = arith.addf %82, %85 : vector<32x256xf32>
    %87 = vector.extract_strided_slice %54 {offsets = [0, 6], sizes = [32, 1], strides = [1, 1]} : vector<32x10xf32> to vector<32x1xf32>
    %88 = vector.broadcast %87 : vector<32x1xf32> to vector<32x256xf32>
    %89 = arith.mulf %88, %59 : vector<32x256xf32>
    %90 = vector.extract_strided_slice %54 {offsets = [0, 7], sizes = [32, 1], strides = [1, 1]} : vector<32x10xf32> to vector<32x1xf32>
    %91 = vector.broadcast %90 : vector<32x1xf32> to vector<32x256xf32>
    %92 = arith.mulf %91, %1 : vector<32x256xf32>
    %93 = arith.addf %89, %92 : vector<32x256xf32>
    %94 = vector.extract_strided_slice %54 {offsets = [0, 8], sizes = [32, 1], strides = [1, 1]} : vector<32x10xf32> to vector<32x1xf32>
    %95 = vector.broadcast %94 : vector<32x1xf32> to vector<32x256xf32>
    %96 = arith.mulf %95, %64 : vector<32x256xf32>
    %97 = arith.addf %93, %96 : vector<32x256xf32>
    %c16_i32_21 = arith.constant 16 : i32
    %98 = tpu.dynamic_rotate %75 by %c16_i32_21 dim 1 : vector<32x256xf32>, i32 -> vector<32x256xf32>
    %cst_22 = arith.constant 0.000000e+00 : f32
    %99 = vector.shape_cast %51 : vector<1x256xi1> to vector<1x256xi1>
    %100 = vector.broadcast %99 : vector<1x256xi1> to vector<32x256xi1>
    %101 = vector.broadcast %cst_22 : f32 to vector<32x256xf32>
    %102 = arith.select %100, %98, %101 : vector<32x256xi1>, vector<32x256xf32>
    %103 = arith.addf %86, %102 : vector<32x256xf32>
    %c240_i32_23 = arith.constant 240 : i32
    %104 = tpu.dynamic_rotate %97 by %c240_i32_23 dim 1 : vector<32x256xf32>, i32 -> vector<32x256xf32>
    %cst_24 = arith.constant 0.000000e+00 : f32
    %105 = vector.shape_cast %53 : vector<1x256xi1> to vector<1x256xi1>
    %106 = vector.broadcast %105 : vector<1x256xi1> to vector<32x256xi1>
    %107 = vector.broadcast %cst_24 : f32 to vector<32x256xf32>
    %108 = arith.select %106, %104, %107 : vector<32x256xi1>, vector<32x256xf32>
    %109 = arith.addf %103, %108 : vector<32x256xf32>
    %110 = vector.extract_strided_slice %54 {offsets = [0, 9], sizes = [32, 1], strides = [1, 1]} : vector<32x10xf32> to vector<32x1xf32>
    %111 = vector.broadcast %110 : vector<32x1xf32> to vector<32x256xf32>
    %112 = arith.addf %109, %111 : vector<32x256xf32>
    %113 = arith.negf %112 : vector<32x256xf32>
    %114 = math.exp %113 : vector<32x256xf32>
    %cst_25 = arith.constant 1.000000e+00 : f32
    %115 = vector.broadcast %cst_25 : f32 to vector<32x256xf32>
    %116 = arith.addf %115, %114 : vector<32x256xf32>
    %117 = arith.divf %115, %116 : vector<32x256xf32>
    %118 = vector.broadcast %28 : vector<32x1xf32> to vector<32x256xf32>
    %119 = arith.mulf %1, %118 : vector<32x256xf32>
    %120 = arith.mulf %119, %117 : vector<32x256xf32>
    %121 = vector.shape_cast %120 : vector<32x256xf32> to vector<8x4x256xf32>
    %122 = tpu.transpose %121, [1, 0, 2] : vector<8x4x256xf32> -> vector<4x8x256xf32>
    %c0_26 = arith.constant 0 : index
    %c0_27 = arith.constant 0 : index
    %c0_28 = arith.constant 0 : index
    %c0_29 = arith.constant 0 : index
    %c0_30 = arith.constant 0 : index
    %123 = vector.load %arg5[%c0_26, %c0_27, %c0_28, %c0_29, %c0_30] : memref<1x1x4x8x256xf32, #tpu.memory_space<vmem>>, vector<1x1x4x8x256xf32>
    %124 = vector.shape_cast %123 : vector<1x1x4x8x256xf32> to vector<4x8x256xf32>
    %125 = vector.shape_cast %122 : vector<4x8x256xf32> to vector<1x1x4x8x256xf32>
    tpu.vector_store %arg5[%c0_26, %c0_27, %c0_28, %c0_29, %c0_30], %125 {strides = array<i32>} : memref<1x1x4x8x256xf32, #tpu.memory_space<vmem>>, vector<1x1x4x8x256xf32>,
    return
  }
  func.func @transform_0(%arg0: i32) -> (i32, i32, i32) {
    %c0_i32 = arith.constant 0 : i32
    %c0_i32_0 = arith.constant 0 : i32
    %c0_i32_1 = arith.constant 0 : i32
    return %arg0, %c0_i32, %c0_i32_0 : i32, i32, i32
  }
  func.func @transform_1(%arg0: i32) -> (i32, i32) {
    %c0_i32 = arith.constant 0 : i32
    %c0_i32_0 = arith.constant 0 : i32
    %c0_i32_1 = arith.constant 0 : i32
    return %c0_i32, %c0_i32_0 : i32, i32
  }
  func.func @transform_2(%arg0: i32) -> (i32, i32) {
    %c0_i32 = arith.constant 0 : i32
    %c0_i32_0 = arith.constant 0 : i32
    %c0_i32_1 = arith.constant 0 : i32
    return %c0_i32, %c0_i32_0 : i32, i32
  }
  func.func @transform_3(%arg0: i32) -> (i32, i32) {
    %c0_i32 = arith.constant 0 : i32
    %c0_i32_0 = arith.constant 0 : i32
    %c0_i32_1 = arith.constant 0 : i32
    return %c0_i32, %c0_i32_0 : i32, i32
  }
  func.func @transform_4(%arg0: i32) -> (i32, i32, i32, i32, i32) {
    %c0_i32 = arith.constant 0 : i32
    %c0_i32_0 = arith.constant 0 : i32
    %c0_i32_1 = arith.constant 0 : i32
    %c0_i32_2 = arith.constant 0 : i32
    %c0_i32_3 = arith.constant 0 : i32
    return %arg0, %c0_i32, %c0_i32_0, %c0_i32_1, %c0_i32_2 : i32, i32, i32, i32, i32
  }
}

</mosaic_0001>

<llo_original>
// kernel: tile.38
$region0: #{tile.38}
  #allocation0 [shape = 's32[1]{0}', space=sflag, size = 0x4, scoped, tag = 'scoped memory for tile.38']
  %s0 = inlined_call_operand.vmem [shape: f32[4], index: 0, kind: input, shape index: {}]
  %s1 = inlined_call_operand.vmem [shape: f32[8,4], index: 1, kind: output, shape index: {}]
  // Predicated region
  $region2: #{tile.38} parent=0 // pred_check
    _
  $region3: #{tile.38} parent=0 // pred_check_branch
    %3 = sbr.rel (0) target = $region5
  $region4: #{tile.38} parent=0 // pred_region
    _
  $region5: #{tile.38} parent=0 // pred_fallthru
    _
  %v4 = vld [vmem:[%s0] ss:$0 sm:$0xff]
  %5 = vst [vmem:[%s1] sm:$0xff] %v4

// kernel: tile.0
$region0: #{tile.0}
  %s0 = inlined_call_operand.vmem [shape: f32[8,4], index: 0, kind: input, shape index: {}]
  %s1 = inlined_call_operand.vmem [shape: f32[32,1], index: 1, kind: output, shape index: {}]
  %v2 = vld [vmem:[%s0] sm:$0xff]
  %vm3 = vcmask 7168
  %4 = vst.msk [vmem:[%s1] ss:$4 sm:$0xff] %vm3, %v2
  %v5 = vld [vmem:[%s0] sm:$0xff]
  %6 = vrot.lane.b32.xlu0 %v5, 127
  %v7 = vpop.permute.xlu0 %6
  %vm8 = vcmask 7168
  %s9 = scalar_lea.vmem %s1, 1
  %10 = vst.msk [vmem:[%s9] ss:$4 sm:$0xff] %vm8, %v7
  %v11 = vld [vmem:[%s0] sm:$0xff]
  %12 = vrot.lane.b32.xlu0 %v11, 126
  %v13 = vpop.permute.xlu0 %12
  %vm14 = vcmask 7168
  %s15 = scalar_lea.vmem %s1, 2
  %16 = vst.msk [vmem:[%s15] ss:$4 sm:$0xff] %vm14, %v13
  %v17 = vld [vmem:[%s0] sm:$0xff]
  %18 = vrot.lane.b32.xlu0 %v17, 125
  %v19 = vpop.permute.xlu0 %18
  %vm20 = vcmask 7168
  %s21 = scalar_lea.vmem %s1, 3
  %22 = vst.msk [vmem:[%s21] ss:$4 sm:$0xff] %vm20, %v19

// kernel: shuffle_attention.1
$region0: #{shuffle_attention.1}
  #allocation0 [shape = 'u32[]', space=smem, size = 0x4, offset = 0x4, fixed_abs, tag = 'smem constant byte address 0x4 - core index']
  #allocation1 [shape = 'u32[144,128]{1,0:T(1,128)}', space=vmem, size = 0x12000, scoped, tag = 'internal scratch']
  %s0 = inlined_call_operand.vmem [shape: f32[2,32,256], index: 0, kind: input, shape index: {}]
  %s1 = inlined_call_operand.vmem [shape: f32[33,8], index: 1, kind: input, shape index: {}]
  %s2 = inlined_call_operand.vmem [shape: f32[32,9], index: 2, kind: input, shape index: {}]
  %s3 = inlined_call_operand.vmem [shape: f32[32,10], index: 3, kind: input, shape index: {}]
  %s4 = inlined_call_operand.vmem [shape: f32[2,1,4,8,256], index: 4, kind: output, shape index: {}]
  %s5 = sld [smem:[#allocation0]]
  $region49: #{shuffle_attention.1} parent=0
    _
  %s7 = ssub.s32 1, %s5
  %s8 = scalar_select 0, %s7, %s5
  loop: start=0, step=1, limit=4
  $region2: #{shuffle_attention.1} parent=0 // loop_pre_header
    _
  $region3: #{shuffle_attention.1} parent=0 // loop_header
    %s10 = sphi 0, %s14
    %p11 = scmp.ge.s32.totalorder %s10, 4
    %s20 = sphi 0, %s22
    %s23 = sphi 0, %s20
    %s24 = sphi 0, %s23
    %s40 = sphi 0, %s24
    %s44 = sphi 0, %s44
    %s46 = sphi 0, %s44
    %s47 = sphi 0, %s46
    %s61 = sphi 0, %s47
    %s65 = sphi 0, %s65
    %s67 = sphi 0, %s65
    %s68 = sphi 0, %s67
    %s82 = sphi 0, %s68
    %s86 = sphi 0, %s86
    %s88 = sphi 0, %s86
    %s89 = sphi 0, %s88
    %s103 = sphi 0, %s89
    %s109 = sphi 0, %s111
    %s112 = sphi 0, %s109
    %s113 = sphi 0, %s112
    %s129 = sphi 0, %s113
  $region4: #{shuffle_attention.1} parent=0 // loop_header_branch
    %13 = sbr.rel (%p11) target = $region8
  $region5: #{shuffle_attention.1} parent=0 // loop_body
    %s15 = ssub.s32 %s10, 1
    %s16 = ssub.s32 %s10, 2
    %s17 = sadd.s32 %s10, 1
    %s18 = ssub.s32 %s10, %s17
    %p19 = scmp.eq.s32.totalorder %s18, 0
    %s21 = sadd.s32 %s20, 1
    %s22 = scalar_select %p19, %s20, %s21
    %p25 = pneg %p19
    %p26 = scmp.eq.s32.totalorder %s10, 1
    %p27 = por %p25, %p26
    %p28 = scmp.ne.s32.totalorder %s20, %s23
    %p29 = scmp.eq.s32.totalorder %s10, 0
    %p30 = por %p28, %p29
    %p31 = scmp.ne.s32.totalorder %s20, %s23
    %p32 = scmp.eq.s32.totalorder %s15, 1
    %p33 = por %p31, %p32
    %p34 = scmp.ne.s32.totalorder %s23, %s24
    %p35 = scmp.eq.s32.totalorder %s15, 0
    %p36 = por %p34, %p35
    %p37 = scmp.ne.s32.totalorder %s23, %s24
    %p38 = scmp.eq.s32.totalorder %s16, 1
    %p39 = por %p37, %p38
    %p41 = scmp.ne.s32.totalorder %s24, %s40
    %p42 = scmp.eq.s32.totalorder %s16, 0
    %p43 = por %p41, %p42
    %s45 = sadd.s32 %s44, 1
    %p48 = scmp.eq.s32.totalorder %s10, 1
    %p49 = scmp.ne.s32.totalorder %s44, %s46
    %p50 = scmp.eq.s32.totalorder %s10, 0
    %p51 = por %p49, %p50
    %p52 = scmp.ne.s32.totalorder %s44, %s46
    %p53 = scmp.eq.s32.totalorder %s15, 1
    %p54 = por %p52, %p53
    %p55 = scmp.ne.s32.totalorder %s46, %s47
    %p56 = scmp.eq.s32.totalorder %s15, 0
    %p57 = por %p55, %p56
    %p58 = scmp.ne.s32.totalorder %s46, %s47
    %p59 = scmp.eq.s32.totalorder %s16, 1
    %p60 = por %p58, %p59
    %p62 = scmp.ne.s32.totalorder %s47, %s61
    %p63 = scmp.eq.s32.totalorder %s16, 0
    %p64 = por %p62, %p63
    %s66 = sadd.s32 %s65, 1
    %p69 = scmp.eq.s32.totalorder %s10, 1
    %p70 = scmp.ne.s32.totalorder %s65, %s67
    %p71 = scmp.eq.s32.totalorder %s10, 0
    %p72 = por %p70, %p71
    %p73 = scmp.ne.s32.totalorder %s65, %s67
    %p74 = scmp.eq.s32.totalorder %s15, 1
    %p75 = por %p73, %p74
    %p76 = scmp.ne.s32.totalorder %s67, %s68
    %p77 = scmp.eq.s32.totalorder %s15, 0
    %p78 = por %p76, %p77
    %p79 = scmp.ne.s32.totalorder %s67, %s68
    %p80 = scmp.eq.s32.totalorder %s16, 1
    %p81 = por %p79, %p80
    %p83 = scmp.ne.s32.totalorder %s68, %s82
    %p84 = scmp.eq.s32.totalorder %s16, 0
    %p85 = por %p83, %p84
    %s87 = sadd.s32 %s86, 1
    %p90 = scmp.eq.s32.totalorder %s10, 1
    %p91 = scmp.ne.s32.totalorder %s86, %s88
    %p92 = scmp.eq.s32.totalorder %s10, 0
    %p93 = por %p91, %p92
    %p94 = scmp.ne.s32.totalorder %s86, %s88
    %p95 = scmp.eq.s32.totalorder %s15, 1
    %p96 = por %p94, %p95
    %p97 = scmp.ne.s32.totalorder %s88, %s89
    %p98 = scmp.eq.s32.totalorder %s15, 0
    %p99 = por %p97, %p98
    %p100 = scmp.ne.s32.totalorder %s88, %s89
    %p101 = scmp.eq.s32.totalorder %s16, 1
    %p102 = por %p100, %p101
    %p104 = scmp.ne.s32.totalorder %s89, %s103
    %p105 = scmp.eq.s32.totalorder %s16, 0
    %p106 = por %p104, %p105
    %s107 = ssub.s32 %s10, %s17
    %p108 = scmp.eq.s32.totalorder %s107, 0
    %s110 = sadd.s32 %s109, 1
    %s111 = scalar_select %p108, %s109, %s110
    %p114 = pneg %p108
    %p115 = scmp.eq.s32.totalorder %s10, 1
    %p116 = por %p114, %p115
    %p117 = scmp.ne.s32.totalorder %s109, %s112
    %p118 = scmp.eq.s32.totalorder %s10, 0
    %p119 = por %p117, %p118
    %p120 = scmp.ne.s32.totalorder %s109, %s112
    %p121 = scmp.eq.s32.totalorder %s15, 1
    %p122 = por %p120, %p121
    %p123 = scmp.ne.s32.totalorder %s112, %s113
    %p124 = scmp.eq.s32.totalorder %s15, 0
    %p125 = por %p123, %p124
    %p126 = scmp.ne.s32.totalorder %s112, %s113
    %p127 = scmp.eq.s32.totalorder %s16, 1
    %p128 = por %p126, %p127
    %p130 = scmp.ne.s32.totalorder %s113, %s129
    %p131 = scmp.eq.s32.totalorder %s16, 0
    %p132 = por %p130, %p131
    %p133 = scmp.le.s32.totalorder 1, %s10
    %p134 = scmp.lt.s32.totalorder %s10, 3
    %p135 = pnand %p133, %p134
    %p136 = pneg %p135
    // Predicated region
    $region9: #{shuffle_attention.1} parent=5 // pred_check
      _
    $region10: #{shuffle_attention.1} parent=5 // pred_check_branch
      %138 = sbr.rel (%p135) target = $region12
    $region11: #{shuffle_attention.1} parent=5 // pred_region
      %s139 = ssub.s32 %s10, 1
      // Predicated region
      $region13: #{shuffle_attention.1} parent=11 // pred_check
        %p140 = pneg %p57
      $region14: #{shuffle_attention.1} parent=11 // pred_check_branch
        %142 = sbr.rel (%p140) target = $region16
      $region15: #{shuffle_attention.1} parent=11 // pred_region
        _
      $region16: #{shuffle_attention.1} parent=11 // pred_fallthru
        _
      // Predicated region
      $region17: #{shuffle_attention.1} parent=11 // pred_check
        %p143 = pneg %p78
      $region18: #{shuffle_attention.1} parent=11 // pred_check_branch
        %145 = sbr.rel (%p143) target = $region20
      $region19: #{shuffle_attention.1} parent=11 // pred_region
        _
      $region20: #{shuffle_attention.1} parent=11 // pred_fallthru
        _
      // Predicated region
      $region21: #{shuffle_attention.1} parent=11 // pred_check
        %p146 = pneg %p99
      $region22: #{shuffle_attention.1} parent=11 // pred_check_branch
        %148 = sbr.rel (%p146) target = $region24
      $region23: #{shuffle_attention.1} parent=11 // pred_region
        _
      $region24: #{shuffle_attention.1} parent=11 // pred_fallthru
        _
    $region12: #{shuffle_attention.1} parent=5 // pred_fallthru
      _
    %p149 = scmp.lt.s32.totalorder %s10, 2
    // Predicated region
    $region25: #{shuffle_attention.1} parent=5 // pred_check
      %p150 = pneg %p149
    $region26: #{shuffle_attention.1} parent=5 // pred_check_branch
      %152 = sbr.rel (%p150) target = $region28
    $region27: #{shuffle_attention.1} parent=5 // pred_region
      // Predicated region
      $region29: #{shuffle_attention.1} parent=27 // pred_check
        %p153 = pneg %p30
      $region30: #{shuffle_attention.1} parent=27 // pred_check_branch
        %155 = sbr.rel (%p153) target = $region32
      $region31: #{shuffle_attention.1} parent=27 // pred_region
        %p156 = scmp.lt.s32.totalorder %s10, 1
        %s157 = scalar_select %p156, %s10, 1
        %s158 = smul.addr %s157, 8
        %s159 = smul.addr %s158, 8
        %s160 = scalar_lea.vmem %s0, %s159
      $region32: #{shuffle_attention.1} parent=27 // pred_fallthru
        _
    $region28: #{shuffle_attention.1} parent=5 // pred_fallthru
      _
    %p161 = scmp.le.s32.totalorder 1, %s10
    %p162 = scmp.lt.s32.totalorder %s10, 3
    %p163 = pnand %p161, %p162
    %p164 = pneg %p163
    // Predicated region
    $region33: #{shuffle_attention.1} parent=5 // pred_check
      _
    $region34: #{shuffle_attention.1} parent=5 // pred_check_branch
      %166 = sbr.rel (%p163) target = $region36
    $region35: #{shuffle_attention.1} parent=5 // pred_region
      %s167 = ssub.s32 %s10, 1
      %p168 = scmp.lt.s32.totalorder %s15, 1
      %s169 = scalar_select %p168, %s15, 1
      %s170 = smul.addr %s169, 8
      %s171 = smul.addr %s170, 8
      %s172 = scalar_lea.vmem %s0, %s171
      %p173 = pneg %p36
      %p174 = pneg %p33
      %p175 = pneg %p57
      %p176 = pneg %p54
      %p177 = pneg %p78
      %p178 = pneg %p75
      %p179 = pneg %p99
      %p180 = pneg %p96
      %p181 = pneg %p125
      %p182 = pneg %p122
      %p183 = scmp.lt.s32.totalorder %s15, 1
      %s184 = scalar_select %p183, %s15, 1
      %s185 = smul.addr %s184, 8
      %s186 = smul.addr %s185, 8
      %s187 = scalar_lea.vmem %s4, %s186
      %p188 = scmp.lt.s32.totalorder %s15, 1
      %s189 = scalar_select %p188, %s15, 1
      %s190 = smul.addr %s189, 8
      %s191 = smul.addr %s190, 8
      %s192 = scalar_lea.vmem %s0, %s191
      %p193 = scmp.lt.s32.totalorder %s15, 1
      %s194 = scalar_select %p193, %s15, 1
      %s195 = smul.addr %s194, 8
      %s196 = smul.addr %s195, 8
      %s197 = scalar_lea.vmem %s4, %s196
      %v198 = vld [vmem:[%s192] sm:$0xff]
      %v199 = vld [vmem:[%s192 + $0x8] sm:$0xff]
      %v200 = vld [vmem:[%s192 + $0x10] sm:$0xff]
      %v201 = vld [vmem:[%s192 + $0x18] sm:$0xff]
      %v202 = vld [vmem:[%s192 + $0x20] sm:$0xff]
      %v203 = vld [vmem:[%s192 + $0x28] sm:$0xff]
      %v204 = vld [vmem:[%s192 + $0x30] sm:$0xff]
      %v205 = vld [vmem:[%s192 + $0x38] sm:$0xff]
      %v206 = vadd.f32 %v198, %v199
      %207 = vadd.xlane.f32.xlu0 %v206
      %v208 = vpop.xlane.xlu0 %207
      %v209 = vadd.f32 %v200, %v201
      %210 = vadd.xlane.f32.xlu0 %v209
      %v211 = vpop.xlane.xlu0 %210
      %v212 = vadd.f32 %v202, %v203
      %213 = vadd.xlane.f32.xlu0 %v212
      %v214 = vpop.xlane.xlu0 %213
      %v215 = vadd.f32 %v204, %v205
      %216 = vadd.xlane.f32.xlu0 %v215
      %v217 = vpop.xlane.xlu0 %216
      %v218 = vmul.f32 %v208, 0.00390625
      %v219 = vmul.f32 %v211, 0.00390625
      %v220 = vmul.f32 %v214, 0.00390625
      %v221 = vmul.f32 %v217, 0.00390625
      %v222 = vld [vmem:[%s1] sm:$0xff]
      %v223 = vld [vmem:[%s1 + $0x8] sm:$0xff]
      %v224 = vld [vmem:[%s1 + $0x10] sm:$0xff]
      %v225 = vld [vmem:[%s1 + $0x18] sm:$0xff]
      %v226 = vld [vmem:[%s1 + $0x20] sm:$0x1]
      %v227 = vmul.f32 %v222, %v218
      %v228 = vmul.f32 %v223, %v219
      %v229 = vmul.f32 %v224, %v220
      %v230 = vmul.f32 %v225, %v221
      %vm231 = vcmask 64512
      %v232 = vsel %vm231, %v227, 0.0
      %v233 = vsel %vm231, %v228, 0.0
      %v234 = vadd.f32 %v232, %v233
      %v235 = vsel %vm231, %v229, 0.0
      %v236 = vadd.f32 %v234, %v235
      %v237 = vsel %vm231, %v230, 0.0
      %v238 = vadd.f32 %v236, %v237
      %v239 = vrot.slane %v238, 4
      %v240 = vadd.f32 %v238, %v239
      %v241 = vrot.slane %v240, 2
      %v242 = vadd.f32 %v240, %v241
      %v243 = vrot.slane %v242, 1
      %v244 = vadd.f32 %v242, %v243
      %v245 = vadd.f32 %v244, %v226
      %v246 = vmax.f32 %v245, 0.0
      %v247 = vld [vmem:[%s2] sm:$0xff]
      %v248 = vld [vmem:[%s2 + $0x8] sm:$0xff]
      %v249 = vld [vmem:[%s2 + $0x10] sm:$0xff]
      %v250 = vld [vmem:[%s2 + $0x18] sm:$0xff]
      %v251 = vlaneseq
      %v252 = vshrl.u32 %v251, 7
      %v253 = vsub.s32 0, %v252
      %v254 = vrot.slane %v246, %v253
      %v255 = vmul.f32 %v247, %v254
      %v256 = vmul.f32 %v248, %v254
      %v257 = vmul.f32 %v249, %v254
      %v258 = vmul.f32 %v250, %v254
      %v259 = vsel %vm231, %v255, 0.0
      %260 = vadd.xlane.f32.xlu0 %v259
      %v261 = vpop.xlane.xlu0 %260
      %v262 = vsel %vm231, %v256, 0.0
      %263 = vadd.xlane.f32.xlu0 %v262
      %v264 = vpop.xlane.xlu0 %263
      %v265 = vsel %vm231, %v257, 0.0
      %266 = vadd.xlane.f32.xlu0 %v265
      %v267 = vpop.xlane.xlu0 %266
      %v268 = vsel %vm231, %v258, 0.0
      %269 = vadd.xlane.f32.xlu0 %v268
      %v270 = vpop.xlane.xlu0 %269
      %v271 = vadd.f32 %v261, %v247
      %v272 = vadd.f32 %v264, %v248
      %v273 = vadd.f32 %v267, %v249
      %v274 = vadd.f32 %v270, %v250
      %v275 = vxor.u32 %v271, 2147483648
      %v276 = vxor.u32 %v272, 2147483648
      %v277 = vxor.u32 %v273, 2147483648
      %v278 = vxor.u32 %v274, 2147483648
      %v279 = vmul.f32 %v275, 1.442695
      %v280 = vpow.pop %v279
      %v281 = vmul.f32 %v276, 1.442695
      %v282 = vpow.pop %v281
      %v283 = vmul.f32 %v277, 1.442695
      %v284 = vpow.pop %v283
      %v285 = vmul.f32 %v278, 1.442695
      %v286 = vpow.pop %v285
      %v287 = vadd.f32 %v280, 1.0
      %v288 = vadd.f32 %v282, 1.0
      %v289 = vadd.f32 %v284, 1.0
      %v290 = vadd.f32 %v286, 1.0
      %v291 = vrcp.pop %v287
      %v292 = vmul.f32 1.0, %v291
      %v293 = vrcp.pop %v288
      %v294 = vmul.f32 1.0, %v293
      %v295 = vrcp.pop %v289
      %v296 = vmul.f32 1.0, %v295
      %v297 = vrcp.pop %v290
      %v298 = vmul.f32 1.0, %v297
      %v299 = vlaneseq
      %v300 = vand.u32 %v299, 127
      %v301 = vadd.s32 %v300, 128
      %vm302 = vcmp.lt.s32.totalorder %v300, 0
      %v303 = vsub.s32 0, %v300
      %v304 = vsel %vm302, %v303, %v300
      %v305 = vshrl.u32 %v304, 4
      %v306 = vand.u32 %v304, 15
      %v307 = vsub.s32 0, %v306
      %v308 = vsel %vm302, %v307, %v306
      %vm309 = vcmp.lt.s32.totalorder %v301, 0
      %v310 = vsub.s32 0, %v301
      %v311 = vsel %vm309, %v310, %v301
      %v312 = vshrl.u32 %v311, 4
      %v313 = vand.u32 %v311, 15
      %v314 = vsub.s32 0, %v313
      %v315 = vsel %vm309, %v314, %v313
      %vm316 = vcmp.ne.s32.totalorder %v308, 0
      %vm317 = vcmp.ne.s32.totalorder %v315, 0
      %vm318 = vcmp.lt.s32.totalorder %v308, 0
      %vm319 = vcmp.lt.s32.totalorder %v315, 0
      %vm320 = vmand %vm318, %vm316
      %vm321 = vmand %vm319, %vm317
      %v322 = vadd.s32 %v308, 16
      %v323 = vadd.s32 %v315, 16
      %v324 = vsel %vm320, %v322, %v308
      %v325 = vsel %vm321, %v323, %v315
      %vm326 = vcmp.ge.s32.totalorder %v324, 1
      %vm327 = vcmp.ge.s32.totalorder %v325, 1
      %vm328 = vcmp.le.s32.totalorder %v324, 14
      %vm329 = vcmp.le.s32.totalorder %v325, 14
      %vm330 = vcmp.ge.s32.totalorder %v300, 16
      %vm331 = vcmp.ge.s32.totalorder %v301, 16
      %vm332 = vcmp.lt.s32.totalorder %v300, 240
      %vm333 = vcmp.lt.s32.totalorder %v301, 240
      %v334 = vld [vmem:[%s3] sm:$0xff]
      %v335 = vld [vmem:[%s3 + $0x8] sm:$0xff]
      %v336 = vld [vmem:[%s3 + $0x10] sm:$0xff]
      %v337 = vld [vmem:[%s3 + $0x18] sm:$0xff]
      %338 = vrot.lane.b32.xlu0 %v198, 1
      %v339 = vpop.permute.xlu0 %338
      %340 = vrot.lane.b32.xlu0 %v200, 1
      %v341 = vpop.permute.xlu0 %340
      %342 = vrot.lane.b32.xlu0 %v202, 1
      %v343 = vpop.permute.xlu0 %342
      %344 = vrot.lane.b32.xlu0 %v204, 1
      %v345 = vpop.permute.xlu0 %344
      %346 = vrot.lane.b32.xlu0 %v199, 1
      %v347 = vpop.permute.xlu0 %346
      %348 = vrot.lane.b32.xlu0 %v201, 1
      %v349 = vpop.permute.xlu0 %348
      %350 = vrot.lane.b32.xlu0 %v203, 1
      %v351 = vpop.permute.xlu0 %350
      %352 = vrot.lane.b32.xlu0 %v205, 1
      %v353 = vpop.permute.xlu0 %352
      %vm354 = vcmp.lt.s32.totalorder %v300, 1
      %v355 = vsel %vm354, %v339, %v347
      %v356 = vsel %vm354, %v341, %v349
      %v357 = vsel %vm354, %v343, %v351
      %v358 = vsel %vm354, %v345, %v353
      %v359 = vsel %vm354, %v347, %v339
      %v360 = vsel %vm354, %v349, %v341
      %v361 = vsel %vm354, %v351, %v343
      %v362 = vsel %vm354, %v353, %v345
      %v363 = vsel %vm326, 1, 0
      %v364 = vsel %vm327, 1, 0
      %vm365 = vcmp.eq.s32.totalorder %v363, 1
      %vm366 = vcmp.eq.s32.totalorder %v364, 1
      %v367 = vsel %vm365, %v359, 0.0
      %v368 = vsel %vm366, %v355, 0.0
      %v369 = vsel %vm365, %v360, 0.0
      %v370 = vsel %vm366, %v356, 0.0
      %v371 = vsel %vm365, %v361, 0.0
      %v372 = vsel %vm366, %v357, 0.0
      %v373 = vsel %vm365, %v362, 0.0
      %v374 = vsel %vm366, %v358, 0.0
      %375 = vrot.lane.b32.xlu0 %v198, 127
      %v376 = vpop.permute.xlu0 %375
      %377 = vrot.lane.b32.xlu0 %v200, 127
      %v378 = vpop.permute.xlu0 %377
      %379 = vrot.lane.b32.xlu0 %v202, 127
      %v380 = vpop.permute.xlu0 %379
      %381 = vrot.lane.b32.xlu0 %v204, 127
      %v382 = vpop.permute.xlu0 %381
      %383 = vrot.lane.b32.xlu0 %v199, 127
      %v384 = vpop.permute.xlu0 %383
      %385 = vrot.lane.b32.xlu0 %v201, 127
      %v386 = vpop.permute.xlu0 %385
      %387 = vrot.lane.b32.xlu0 %v203, 127
      %v388 = vpop.permute.xlu0 %387
      %389 = vrot.lane.b32.xlu0 %v205, 127
      %v390 = vpop.permute.xlu0 %389
      %vm391 = vcmp.lt.s32.totalorder %v300, 127
      %v392 = vsel %vm391, %v376, %v384
      %v393 = vsel %vm391, %v378, %v386
      %v394 = vsel %vm391, %v380, %v388
      %v395 = vsel %vm391, %v382, %v390
      %v396 = vsel %vm391, %v384, %v376
      %v397 = vsel %vm391, %v386, %v378
      %v398 = vsel %vm391, %v388, %v380
      %v399 = vsel %vm391, %v390, %v382
      %v400 = vsel %vm328, 1, 0
      %v401 = vsel %vm329, 1, 0
      %vm402 = vcmp.eq.s32.totalorder %v400, 1
      %vm403 = vcmp.eq.s32.totalorder %v401, 1
      %v404 = vsel %vm402, %v392, 0.0
      %v405 = vsel %vm403, %v396, 0.0
      %v406 = vsel %vm402, %v393, 0.0
      %v407 = vsel %vm403, %v397, 0.0
      %v408 = vsel %vm402, %v394, 0.0
      %v409 = vsel %vm403, %v398, 0.0
      %v410 = vsel %vm402, %v395, 0.0
      %v411 = vsel %vm403, %v399, 0.0
      %413 = vset.pattern.permute.xlu0 0
      %414 = vperm.xlu0 %413, %v334
      %v415 = vpop.permute.xlu0 %414
      %418 = vset.pattern.permute.xlu0 0
      %419 = vperm.xlu0 %418, %v335
      %v420 = vpop.permute.xlu0 %419
      %423 = vset.pattern.permute.xlu0 0
      %424 = vperm.xlu0 %423, %v336
      %v425 = vpop.permute.xlu0 %424
      %428 = vset.pattern.permute.xlu0 0
      %429 = vperm.xlu0 %428, %v337
      %v430 = vpop.permute.xlu0 %429
      %v432 = vmul.f32 %v415, %v367
      %v433 = vmul.f32 %v415, %v368
      %v434 = vmul.f32 %v420, %v369
      %v435 = vmul.f32 %v420, %v370
      %v436 = vmul.f32 %v425, %v371
      %v437 = vmul.f32 %v425, %v372
      %v438 = vmul.f32 %v430, %v373
      %v439 = vmul.f32 %v430, %v374
      %440 = vset.pattern.permute.xlu0 1
      %441 = vperm.xlu0 %440, %v334
      %v442 = vpop.permute.xlu0 %441
      %444 = vset.pattern.permute.xlu0 1
      %445 = vperm.xlu0 %444, %v335
      %v446 = vpop.permute.xlu0 %445
      %448 = vset.pattern.permute.xlu0 1
      %449 = vperm.xlu0 %448, %v336
      %v450 = vpop.permute.xlu0 %449
      %452 = vset.pattern.permute.xlu0 1
      %453 = vperm.xlu0 %452, %v337
      %v454 = vpop.permute.xlu0 %453
      %v456 = vmul.f32 %v442, %v198
      %v457 = vmul.f32 %v442, %v199
      %v458 = vmul.f32 %v446, %v200
      %v459 = vmul.f32 %v446, %v201
      %v460 = vmul.f32 %v450, %v202
      %v461 = vmul.f32 %v450, %v203
      %v462 = vmul.f32 %v454, %v204
      %v463 = vmul.f32 %v454, %v205
      %v464 = vadd.f32 %v432, %v456
      %v465 = vadd.f32 %v433, %v457
      %v466 = vadd.f32 %v434, %v458
      %v467 = vadd.f32 %v435, %v459
      %v468 = vadd.f32 %v436, %v460
      %v469 = vadd.f32 %v437, %v461
      %v470 = vadd.f32 %v438, %v462
      %v471 = vadd.f32 %v439, %v463
      %472 = vset.pattern.permute.xlu0 2
      %473 = vperm.xlu0 %472, %v334
      %v474 = vpop.permute.xlu0 %473
      %476 = vset.pattern.permute.xlu0 2
      %477 = vperm.xlu0 %476, %v335
      %v478 = vpop.permute.xlu0 %477
      %480 = vset.pattern.permute.xlu0 2
      %481 = vperm.xlu0 %480, %v336
      %v482 = vpop.permute.xlu0 %481
      %484 = vset.pattern.permute.xlu0 2
      %485 = vperm.xlu0 %484, %v337
      %v486 = vpop.permute.xlu0 %485
      %v488 = vmul.f32 %v474, %v404
      %v489 = vmul.f32 %v474, %v405
      %v490 = vmul.f32 %v478, %v406
      %v491 = vmul.f32 %v478, %v407
      %v492 = vmul.f32 %v482, %v408
      %v493 = vmul.f32 %v482, %v409
      %v494 = vmul.f32 %v486, %v410
      %v495 = vmul.f32 %v486, %v411
      %v496 = vadd.f32 %v464, %v488
      %v497 = vadd.f32 %v465, %v489
      %v498 = vadd.f32 %v466, %v490
      %v499 = vadd.f32 %v467, %v491
      %v500 = vadd.f32 %v468, %v492
      %v501 = vadd.f32 %v469, %v493
      %v502 = vadd.f32 %v470, %v494
      %v503 = vadd.f32 %v471, %v495
      %504 = vset.pattern.permute.xlu0 3
      %505 = vperm.xlu0 %504, %v334
      %v506 = vpop.permute.xlu0 %505
      %508 = vset.pattern.permute.xlu0 3
      %509 = vperm.xlu0 %508, %v335
      %v510 = vpop.permute.xlu0 %509
      %512 = vset.pattern.permute.xlu0 3
      %513 = vperm.xlu0 %512, %v336
      %v514 = vpop.permute.xlu0 %513
      %516 = vset.pattern.permute.xlu0 3
      %517 = vperm.xlu0 %516, %v337
      %v518 = vpop.permute.xlu0 %517
      %v520 = vmul.f32 %v506, %v367
      %v521 = vmul.f32 %v506, %v368
      %v522 = vmul.f32 %v510, %v369
      %v523 = vmul.f32 %v510, %v370
      %v524 = vmul.f32 %v514, %v371
      %v525 = vmul.f32 %v514, %v372
      %v526 = vmul.f32 %v518, %v373
      %v527 = vmul.f32 %v518, %v374
      %528 = vset.pattern.permute.xlu0 4
      %529 = vperm.xlu0 %528, %v334
      %v530 = vpop.permute.xlu0 %529
      %532 = vset.pattern.permute.xlu0 4
      %533 = vperm.xlu0 %532, %v335
      %v534 = vpop.permute.xlu0 %533
      %536 = vset.pattern.permute.xlu0 4
      %537 = vperm.xlu0 %536, %v336
      %v538 = vpop.permute.xlu0 %537
      %540 = vset.pattern.permute.xlu0 4
      %541 = vperm.xlu0 %540, %v337
      %v542 = vpop.permute.xlu0 %541
      %v544 = vmul.f32 %v530, %v198
      %v545 = vmul.f32 %v530, %v199
      %v546 = vmul.f32 %v534, %v200
      %v547 = vmul.f32 %v534, %v201
      %v548 = vmul.f32 %v538, %v202
      %v549 = vmul.f32 %v538, %v203
      %v550 = vmul.f32 %v542, %v204
      %v551 = vmul.f32 %v542, %v205
      %v552 = vadd.f32 %v520, %v544
      %v553 = vadd.f32 %v521, %v545
      %v554 = vadd.f32 %v522, %v546
      %v555 = vadd.f32 %v523, %v547
      %v556 = vadd.f32 %v524, %v548
      %v557 = vadd.f32 %v525, %v549
      %v558 = vadd.f32 %v526, %v550
      %v559 = vadd.f32 %v527, %v551
      %560 = vset.pattern.permute.xlu0 5
      %561 = vperm.xlu0 %560, %v334
      %v562 = vpop.permute.xlu0 %561
      %564 = vset.pattern.permute.xlu0 5
      %565 = vperm.xlu0 %564, %v335
      %v566 = vpop.permute.xlu0 %565
      %568 = vset.pattern.permute.xlu0 5
      %569 = vperm.xlu0 %568, %v336
      %v570 = vpop.permute.xlu0 %569
      %572 = vset.pattern.permute.xlu0 5
      %573 = vperm.xlu0 %572, %v337
      %v574 = vpop.permute.xlu0 %573
      %v576 = vmul.f32 %v562, %v404
      %v577 = vmul.f32 %v562, %v405
      %v578 = vmul.f32 %v566, %v406
      %v579 = vmul.f32 %v566, %v407
      %v580 = vmul.f32 %v570, %v408
      %v581 = vmul.f32 %v570, %v409
      %v582 = vmul.f32 %v574, %v410
      %v583 = vmul.f32 %v574, %v411
      %v584 = vadd.f32 %v552, %v576
      %v585 = vadd.f32 %v553, %v577
      %v586 = vadd.f32 %v554, %v578
      %v587 = vadd.f32 %v555, %v579
      %v588 = vadd.f32 %v556, %v580
      %v589 = vadd.f32 %v557, %v581
      %v590 = vadd.f32 %v558, %v582
      %v591 = vadd.f32 %v559, %v583
      %592 = vset.pattern.permute.xlu0 6
      %593 = vperm.xlu0 %592, %v334
      %v594 = vpop.permute.xlu0 %593
      %596 = vset.pattern.permute.xlu0 6
      %597 = vperm.xlu0 %596, %v335
      %v598 = vpop.permute.xlu0 %597
      %600 = vset.pattern.permute.xlu0 6
      %601 = vperm.xlu0 %600, %v336
      %v602 = vpop.permute.xlu0 %601
      %604 = vset.pattern.permute.xlu0 6
      %605 = vperm.xlu0 %604, %v337
      %v606 = vpop.permute.xlu0 %605
      %v608 = vmul.f32 %v594, %v367
      %v609 = vmul.f32 %v594, %v368
      %v610 = vmul.f32 %v598, %v369
      %v611 = vmul.f32 %v598, %v370
      %v612 = vmul.f32 %v602, %v371
      %v613 = vmul.f32 %v602, %v372
      %v614 = vmul.f32 %v606, %v373
      %v615 = vmul.f32 %v606, %v374
      %616 = vset.pattern.permute.xlu0 7
      %617 = vperm.xlu0 %616, %v334
      %v618 = vpop.permute.xlu0 %617
      %620 = vset.pattern.permute.xlu0 7
      %621 = vperm.xlu0 %620, %v335
      %v622 = vpop.permute.xlu0 %621
      %624 = vset.pattern.permute.xlu0 7
      %625 = vperm.xlu0 %624, %v336
      %v626 = vpop.permute.xlu0 %625
      %628 = vset.pattern.permute.xlu0 7
      %629 = vperm.xlu0 %628, %v337
      %v630 = vpop.permute.xlu0 %629
      %v632 = vmul.f32 %v618, %v198
      %v633 = vmul.f32 %v618, %v199
      %v634 = vmul.f32 %v622, %v200
      %v635 = vmul.f32 %v622, %v201
      %v636 = vmul.f32 %v626, %v202
      %v637 = vmul.f32 %v626, %v203
      %v638 = vmul.f32 %v630, %v204
      %v639 = vmul.f32 %v630, %v205
      %v640 = vadd.f32 %v608, %v632
      %v641 = vadd.f32 %v609, %v633
      %v642 = vadd.f32 %v610, %v634
      %v643 = vadd.f32 %v611, %v635
      %v644 = vadd.f32 %v612, %v636
      %v645 = vadd.f32 %v613, %v637
      %v646 = vadd.f32 %v614, %v638
      %v647 = vadd.f32 %v615, %v639
      %648 = vset.pattern.permute.xlu0 8
      %649 = vperm.xlu0 %648, %v334
      %v650 = vpop.permute.xlu0 %649
      %652 = vset.pattern.permute.xlu0 8
      %653 = vperm.xlu0 %652, %v335
      %v654 = vpop.permute.xlu0 %653
      %656 = vset.pattern.permute.xlu0 8
      %657 = vperm.xlu0 %656, %v336
      %v658 = vpop.permute.xlu0 %657
      %660 = vset.pattern.permute.xlu0 8
      %661 = vperm.xlu0 %660, %v337
      %v662 = vpop.permute.xlu0 %661
      %v664 = vmul.f32 %v650, %v404
      %v665 = vmul.f32 %v650, %v405
      %v666 = vmul.f32 %v654, %v406
      %v667 = vmul.f32 %v654, %v407
      %v668 = vmul.f32 %v658, %v408
      %v669 = vmul.f32 %v658, %v409
      %v670 = vmul.f32 %v662, %v410
      %v671 = vmul.f32 %v662, %v411
      %v672 = vadd.f32 %v640, %v664
      %v673 = vadd.f32 %v641, %v665
      %v674 = vadd.f32 %v642, %v666
      %v675 = vadd.f32 %v643, %v667
      %v676 = vadd.f32 %v644, %v668
      %v677 = vadd.f32 %v645, %v669
      %v678 = vadd.f32 %v646, %v670
      %v679 = vadd.f32 %v647, %v671
      %680 = vrot.lane.b32.xlu0 %v496, 16
      %v681 = vpop.permute.xlu0 %680
      %682 = vrot.lane.b32.xlu0 %v498, 16
      %v683 = vpop.permute.xlu0 %682
      %684 = vrot.lane.b32.xlu0 %v500, 16
      %v685 = vpop.permute.xlu0 %684
      %686 = vrot.lane.b32.xlu0 %v502, 16
      %v687 = vpop.permute.xlu0 %686
      %688 = vrot.lane.b32.xlu0 %v497, 16
      %v689 = vpop.permute.xlu0 %688
      %690 = vrot.lane.b32.xlu0 %v499, 16
      %v691 = vpop.permute.xlu0 %690
      %692 = vrot.lane.b32.xlu0 %v501, 16
      %v693 = vpop.permute.xlu0 %692
      %694 = vrot.lane.b32.xlu0 %v503, 16
      %v695 = vpop.permute.xlu0 %694
      %vm696 = vcmp.lt.s32.totalorder %v300, 16
      %v697 = vsel %vm696, %v681, %v689
      %v698 = vsel %vm696, %v683, %v691
      %v699 = vsel %vm696, %v685, %v693
      %v700 = vsel %vm696, %v687, %v695
      %v701 = vsel %vm696, %v689, %v681
      %v702 = vsel %vm696, %v691, %v683
      %v703 = vsel %vm696, %v693, %v685
      %v704 = vsel %vm696, %v695, %v687
      %v705 = vsel %vm330, 1, 0
      %v706 = vsel %vm331, 1, 0
      %vm707 = vcmp.eq.s32.totalorder %v705, 1
      %vm708 = vcmp.eq.s32.totalorder %v706, 1
      %v709 = vsel %vm707, %v701, 0.0
      %v710 = vsel %vm708, %v697, 0.0
      %v711 = vsel %vm707, %v702, 0.0
      %v712 = vsel %vm708, %v698, 0.0
      %v713 = vsel %vm707, %v703, 0.0
      %v714 = vsel %vm708, %v699, 0.0
      %v715 = vsel %vm707, %v704, 0.0
      %v716 = vsel %vm708, %v700, 0.0
      %v717 = vadd.f32 %v584, %v709
      %v718 = vadd.f32 %v585, %v710
      %v719 = vadd.f32 %v586, %v711
      %v720 = vadd.f32 %v587, %v712
      %v721 = vadd.f32 %v588, %v713
      %v722 = vadd.f32 %v589, %v714
      %v723 = vadd.f32 %v590, %v715
      %v724 = vadd.f32 %v591, %v716
      %725 = vrot.lane.b32.xlu0 %v672, 112
      %v726 = vpop.permute.xlu0 %725
      %727 = vrot.lane.b32.xlu0 %v674, 112
      %v728 = vpop.permute.xlu0 %727
      %729 = vrot.lane.b32.xlu0 %v676, 112
      %v730 = vpop.permute.xlu0 %729
      %731 = vrot.lane.b32.xlu0 %v678, 112
      %v732 = vpop.permute.xlu0 %731
      %733 = vrot.lane.b32.xlu0 %v673, 112
      %v734 = vpop.permute.xlu0 %733
      %735 = vrot.lane.b32.xlu0 %v675, 112
      %v736 = vpop.permute.xlu0 %735
      %737 = vrot.lane.b32.xlu0 %v677, 112
      %v738 = vpop.permute.xlu0 %737
      %739 = vrot.lane.b32.xlu0 %v679, 112
      %v740 = vpop.permute.xlu0 %739
      %vm741 = vcmp.lt.s32.totalorder %v300, 112
      %v742 = vsel %vm741, %v726, %v734
      %v743 = vsel %vm741, %v728, %v736
      %v744 = vsel %vm741, %v730, %v738
      %v745 = vsel %vm741, %v732, %v740
      %v746 = vsel %vm741, %v734, %v726
      %v747 = vsel %vm741, %v736, %v728
      %v748 = vsel %vm741, %v738, %v730
      %v749 = vsel %vm741, %v740, %v732
      %v750 = vsel %vm332, 1, 0
      %v751 = vsel %vm333, 1, 0
      %vm752 = vcmp.eq.s32.totalorder %v750, 1
      %vm753 = vcmp.eq.s32.totalorder %v751, 1
      %v754 = vsel %vm752, %v742, 0.0
      %v755 = vsel %vm753, %v746, 0.0
      %v756 = vsel %vm752, %v743, 0.0
      %v757 = vsel %vm753, %v747, 0.0
      %v758 = vsel %vm752, %v744, 0.0
      %v759 = vsel %vm753, %v748, 0.0
      %v760 = vsel %vm752, %v745, 0.0
      %v761 = vsel %vm753, %v749, 0.0
      %v762 = vadd.f32 %v717, %v754
      %v763 = vadd.f32 %v718, %v755
      %v764 = vadd.f32 %v719, %v756
      %v765 = vadd.f32 %v720, %v757
      %v766 = vadd.f32 %v721, %v758
      %v767 = vadd.f32 %v722, %v759
      %v768 = vadd.f32 %v723, %v760
      %v769 = vadd.f32 %v724, %v761
      %770 = vset.pattern.permute.xlu0 9
      %771 = vperm.xlu0 %770, %v334
      %v772 = vpop.permute.xlu0 %771
      %774 = vset.pattern.permute.xlu0 9
      %775 = vperm.xlu0 %774, %v335
      %v776 = vpop.permute.xlu0 %775
      %778 = vset.pattern.permute.xlu0 9
      %779 = vperm.xlu0 %778, %v336
      %v780 = vpop.permute.xlu0 %779
      %782 = vset.pattern.permute.xlu0 9
      %783 = vperm.xlu0 %782, %v337
      %v784 = vpop.permute.xlu0 %783
      %v786 = vadd.f32 %v762, %v772
      %v787 = vadd.f32 %v763, %v772
      %v788 = vadd.f32 %v764, %v776
      %v789 = vadd.f32 %v765, %v776
      %v790 = vadd.f32 %v766, %v780
      %v791 = vadd.f32 %v767, %v780
      %v792 = vadd.f32 %v768, %v784
      %v793 = vadd.f32 %v769, %v784
      %v794 = vxor.u32 %v786, 2147483648
      %v795 = vxor.u32 %v787, 2147483648
      %v796 = vxor.u32 %v788, 2147483648
      %v797 = vxor.u32 %v789, 2147483648
      %v798 = vxor.u32 %v790, 2147483648
      %v799 = vxor.u32 %v791, 2147483648
      %v800 = vxor.u32 %v792, 2147483648
      %v801 = vxor.u32 %v793, 2147483648
      %v802 = vmul.f32 %v794, 1.442695
      %v803 = vpow.pop %v802
      %v804 = vmul.f32 %v795, 1.442695
      %v805 = vpow.pop %v804
      %v806 = vmul.f32 %v796, 1.442695
      %v807 = vpow.pop %v806
      %v808 = vmul.f32 %v797, 1.442695
      %v809 = vpow.pop %v808
      %v810 = vmul.f32 %v798, 1.442695
      %v811 = vpow.pop %v810
      %v812 = vmul.f32 %v799, 1.442695
      %v813 = vpow.pop %v812
      %v814 = vmul.f32 %v800, 1.442695
      %v815 = vpow.pop %v814
      %v816 = vmul.f32 %v801, 1.442695
      %v817 = vpow.pop %v816
      %v818 = vadd.f32 %v803, 1.0
      %v819 = vadd.f32 %v805, 1.0
      %v820 = vadd.f32 %v807, 1.0
      %v821 = vadd.f32 %v809, 1.0
      %v822 = vadd.f32 %v811, 1.0
      %v823 = vadd.f32 %v813, 1.0
      %v824 = vadd.f32 %v815, 1.0
      %v825 = vadd.f32 %v817, 1.0
      %v826 = vrcp.pop %v818
      %v827 = vmul.f32 1.0, %v826
      %v828 = vrcp.pop %v819
      %v829 = vmul.f32 1.0, %v828
      %v830 = vrcp.pop %v820
      %v831 = vmul.f32 1.0, %v830
      %v832 = vrcp.pop %v821
      %v833 = vmul.f32 1.0, %v832
      %v834 = vrcp.pop %v822
      %v835 = vmul.f32 1.0, %v834
      %v836 = vrcp.pop %v823
      %v837 = vmul.f32 1.0, %v836
      %v838 = vrcp.pop %v824
      %v839 = vmul.f32 1.0, %v838
      %v840 = vrcp.pop %v825
      %v841 = vmul.f32 1.0, %v840
      %843 = vset.pattern.permute.xlu0 8
      %844 = vperm.xlu0 %843, %v292
      %v845 = vpop.permute.xlu0 %844
      %848 = vset.pattern.permute.xlu0 8
      %849 = vperm.xlu0 %848, %v294
      %v850 = vpop.permute.xlu0 %849
      %853 = vset.pattern.permute.xlu0 8
      %854 = vperm.xlu0 %853, %v296
      %v855 = vpop.permute.xlu0 %854
      %858 = vset.pattern.permute.xlu0 8
      %859 = vperm.xlu0 %858, %v298
      %v860 = vpop.permute.xlu0 %859
      %v862 = vmul.f32 %v198, %v845
      %v863 = vmul.f32 %v199, %v845
      %v864 = vmul.f32 %v200, %v850
      %v865 = vmul.f32 %v201, %v850
      %v866 = vmul.f32 %v202, %v855
      %v867 = vmul.f32 %v203, %v855
      %v868 = vmul.f32 %v204, %v860
      %v869 = vmul.f32 %v205, %v860
      %v870 = vmul.f32 %v862, %v827
      %v871 = vmul.f32 %v863, %v829
      %v872 = vmul.f32 %v864, %v831
      %v873 = vmul.f32 %v865, %v833
      %v874 = vmul.f32 %v866, %v835
      %v875 = vmul.f32 %v867, %v837
      %v876 = vmul.f32 %v868, %v839
      %v877 = vmul.f32 %v869, %v841
      %v886 = vcombine.low %v870, %v871
      %v887 = vcombine.high %v870, %v871
      %v888 = vcombine.low %v872, %v873
      %v889 = vcombine.high %v872, %v873
      %v890 = vcombine.low %v874, %v875
      %v891 = vcombine.high %v874, %v875
      %v892 = vcombine.low %v876, %v877
      %v893 = vcombine.high %v876, %v877
      %v902 = vcombine.low %v886, %v888
      %v903 = vcombine.high %v886, %v888
      %v905 = vunpack.c.l.s4 1983009808
      %v906 = vunpack.c.0.s8 %v905
      %v907 = vlaneseq
      %v908 = vshrl.u32 %v907, 7
      %v909 = vsub.s32 %v906, %v908
      %v910 = vrot.slane %v902, %v909
      %v912 = vunpack.c.l.s4 1983009808
      %v913 = vunpack.c.0.s8 %v912
      %v914 = vlaneseq
      %v915 = vshrl.u32 %v914, 7
      %v916 = vsub.s32 %v913, %v915
      %v917 = vrot.slane %v903, %v916
      %v918 = vcombine.low %v887, %v889
      %v919 = vcombine.high %v887, %v889
      %v921 = vunpack.c.l.s4 1983009808
      %v922 = vunpack.c.0.s8 %v921
      %v923 = vlaneseq
      %v924 = vshrl.u32 %v923, 7
      %v925 = vsub.s32 %v922, %v924
      %v926 = vrot.slane %v918, %v925
      %v928 = vunpack.c.l.s4 1983009808
      %v929 = vunpack.c.0.s8 %v928
      %v930 = vlaneseq
      %v931 = vshrl.u32 %v930, 7
      %v932 = vsub.s32 %v929, %v931
      %v933 = vrot.slane %v919, %v932
      %v934 = vcombine.low %v910, %v926
      %v935 = vcombine.high %v910, %v926
      %v937 = vunpack.c.l.s4 1934713408
      %v938 = vunpack.c.0.s8 %v937
      %v939 = vlaneseq
      %v940 = vshrl.u32 %v939, 7
      %v941 = vsub.s32 %v938, %v940
      %v942 = vrot.slane %v934, %v941
      %v944 = vunpack.c.l.s4 1934713408
      %v945 = vunpack.c.0.s8 %v944
      %v946 = vlaneseq
      %v947 = vshrl.u32 %v946, 7
      %v948 = vsub.s32 %v945, %v947
      %v949 = vrot.slane %v935, %v948
      %v950 = vcombine.low %v917, %v933
      %v951 = vcombine.high %v917, %v933
      %v953 = vunpack.c.l.s4 1934713408
      %v954 = vunpack.c.0.s8 %v953
      %v955 = vlaneseq
      %v956 = vshrl.u32 %v955, 7
      %v957 = vsub.s32 %v954, %v956
      %v958 = vrot.slane %v950, %v957
      %v960 = vunpack.c.l.s4 1934713408
      %v961 = vunpack.c.0.s8 %v960
      %v962 = vlaneseq
      %v963 = vshrl.u32 %v962, 7
      %v964 = vsub.s32 %v961, %v963
      %v965 = vrot.slane %v951, %v964
      %v966 = vcombine.low %v942, %v958
      %v967 = vcombine.high %v942, %v958
      %v968 = vcombine.low %v949, %v965
      %v969 = vcombine.high %v949, %v965
      %v970 = vcombine.low %v890, %v892
      %v971 = vcombine.high %v890, %v892
      %v973 = vunpack.c.l.s4 1983009808
      %v974 = vunpack.c.0.s8 %v973
      %v975 = vlaneseq
      %v976 = vshrl.u32 %v975, 7
      %v977 = vsub.s32 %v974, %v976
      %v978 = vrot.slane %v970, %v977
      %v980 = vunpack.c.l.s4 1983009808
      %v981 = vunpack.c.0.s8 %v980
      %v982 = vlaneseq
      %v983 = vshrl.u32 %v982, 7
      %v984 = vsub.s32 %v981, %v983
      %v985 = vrot.slane %v971, %v984
      %v986 = vcombine.low %v891, %v893
      %v987 = vcombine.high %v891, %v893
      %v989 = vunpack.c.l.s4 1983009808
      %v990 = vunpack.c.0.s8 %v989
      %v991 = vlaneseq
      %v992 = vshrl.u32 %v991, 7
      %v993 = vsub.s32 %v990, %v992
      %v994 = vrot.slane %v986, %v993
      %v996 = vunpack.c.l.s4 1983009808
      %v997 = vunpack.c.0.s8 %v996
      %v998 = vlaneseq
      %v999 = vshrl.u32 %v998, 7
      %v1000 = vsub.s32 %v997, %v999
      %v1001 = vrot.slane %v987, %v1000
      %v1002 = vcombine.low %v978, %v994
      %v1003 = vcombine.high %v978, %v994
      %v1005 = vunpack.c.l.s4 1934713408
      %v1006 = vunpack.c.0.s8 %v1005
      %v1007 = vlaneseq
      %v1008 = vshrl.u32 %v1007, 7
      %v1009 = vsub.s32 %v1006, %v1008
      %v1010 = vrot.slane %v1002, %v1009
      %v1012 = vunpack.c.l.s4 1934713408
      %v1013 = vunpack.c.0.s8 %v1012
      %v1014 = vlaneseq
      %v1015 = vshrl.u32 %v1014, 7
      %v1016 = vsub.s32 %v1013, %v1015
      %v1017 = vrot.slane %v1003, %v1016
      %v1018 = vcombine.low %v985, %v1001
      %v1019 = vcombine.high %v985, %v1001
      %v1021 = vunpack.c.l.s4 1934713408
      %v1022 = vunpack.c.0.s8 %v1021
      %v1023 = vlaneseq
      %v1024 = vshrl.u32 %v1023, 7
      %v1025 = vsub.s32 %v1022, %v1024
      %v1026 = vrot.slane %v1018, %v1025
      %v1028 = vunpack.c.l.s4 1934713408
      %v1029 = vunpack.c.0.s8 %v1028
      %v1030 = vlaneseq
      %v1031 = vshrl.u32 %v1030, 7
      %v1032 = vsub.s32 %v1029, %v1031
      %v1033 = vrot.slane %v1019, %v1032
      %v1034 = vcombine.low %v1010, %v1026
      %v1035 = vcombine.high %v1010, %v1026
      %v1036 = vcombine.low %v1017, %v1033
      %v1037 = vcombine.high %v1017, %v1033
      %v1046 = vcombine.low %v966, %v1034
      %v1047 = vcombine.high %v966, %v1034
      %v1048 = vcombine.low %v967, %v1035
      %v1049 = vcombine.high %v967, %v1035
      %v1050 = vcombine.low %v968, %v1036
      %v1051 = vcombine.high %v968, %v1036
      %v1052 = vcombine.low %v969, %v1037
      %v1053 = vcombine.high %v969, %v1037
      %1062 = vst [vmem:[%s197] sm:$0xff] %v1046
      %1063 = vst [vmem:[%s197 + $0x8] sm:$0xff] %v1047
      %1064 = vst [vmem:[%s197 + $0x10] sm:$0xff] %v1048
      %1065 = vst [vmem:[%s197 + $0x18] sm:$0xff] %v1049
      %1066 = vst [vmem:[%s197 + $0x20] sm:$0xff] %v1050
      %1067 = vst [vmem:[%s197 + $0x28] sm:$0xff] %v1051
      %1068 = vst [vmem:[%s197 + $0x30] sm:$0xff] %v1052
      %1069 = vst [vmem:[%s197 + $0x38] sm:$0xff] %v1053
      %p1070 = scmp.lt.s32.totalorder %s15, 1
      %s1071 = scalar_select %p1070, %s15, 1
      %s1072 = smul.addr %s1071, 8
      %s1073 = smul.addr %s1072, 8
      %s1074 = scalar_lea.vmem %s4, %s1073
      // Predicated region
      $region37: #{shuffle_attention.1} parent=35 // pred_check
        %p1075 = pneg %p122
      $region38: #{shuffle_attention.1} parent=35 // pred_check_branch
        %1077 = sbr.rel (%p1075) target = $region40
      $region39: #{shuffle_attention.1} parent=35 // pred_region
        _
      $region40: #{shuffle_attention.1} parent=35 // pred_fallthru
        _
    $region36: #{shuffle_attention.1} parent=5 // pred_fallthru
      _
    %p1078 = scmp.le.s32.totalorder 2, %s10
    // Predicated region
    $region41: #{shuffle_attention.1} parent=5 // pred_check
      %p1079 = pneg %p1078
    $region42: #{shuffle_attention.1} parent=5 // pred_check_branch
      %1081 = sbr.rel (%p1079) target = $region44
    $region43: #{shuffle_attention.1} parent=5 // pred_region
      %s1082 = ssub.s32 %s10, 2
      // Predicated region
      $region45: #{shuffle_attention.1} parent=43 // pred_check
        %p1083 = pneg %p128
      $region46: #{shuffle_attention.1} parent=43 // pred_check_branch
        %1085 = sbr.rel (%p1083) target = $region48
      $region47: #{shuffle_attention.1} parent=43 // pred_region
        %p1086 = scmp.lt.s32.totalorder %s16, 1
        %s1087 = scalar_select %p1086, %s16, 1
        %s1088 = smul.addr %s1087, 8
        %s1089 = smul.addr %s1088, 8
        %s1090 = scalar_lea.vmem %s4, %s1089
      $region48: #{shuffle_attention.1} parent=43 // pred_fallthru
        _
    $region44: #{shuffle_attention.1} parent=5 // pred_fallthru
      _
  $region6: #{shuffle_attention.1} parent=0 // loop_footer
    %s14 = sadd.s32 1, %s10
  $region7: #{shuffle_attention.1} parent=0 // loop_footer_branch
    %9 = sbr.rel target = $region3
  $region8: #{shuffle_attention.1} parent=0 // loop_exit
    _

</llo_original>
